<compile_context>
chip_gen: v5e
topology: v5e:2x2
jax: 0.10.0
libtpu: 0.0.40
codegen_flags: <defaults>
</compile_context>

<pallas_src>
import functools

import jax
import jax.numpy as jnp
from jax import lax
from jax.experimental import pallas as pl
from jax.experimental.pallas import tpu as pltpu


def _gated_mlp_kernel(x_ref, wgu_ref, wd_ref, o_ref, acc_ref, *, ti):
    # x_ref:   (tm, H)       activations
    # wgu_ref: (2*ti, H)     interleaved [gate-tile; up-tile] weight rows
    # wd_ref:  (ti, H)       down-proj weight rows (pre-transposed to [I, H])
    # o_ref:   (tm, H)       output rows
    # acc_ref: (tm, H) f32   accumulator, resident across the k (I) axis
    k = pl.program_id(1)

    @pl.when(k == 0)
    def _():
        acc_ref[...] = jnp.zeros_like(acc_ref)

    x = x_ref[...]

    # Fused gate+up matmul: contract H (last dim of both operands), i.e. x @ Wgu^T.
    gu = lax.dot_general(x, wgu_ref[...], (((1,), (1,)), ((), ())),
                         preferred_element_type=jnp.float32)          # (tm, 2*ti)
    gate = gu[:, :ti]
    up = gu[:, ti:]

    # SwiGLU activation in f32 (EUP sigmoid overlaps MXU work).
    h = gate * jax.nn.sigmoid(gate) * up                               # (tm, ti) f32

    # Partial down projection: (tm, ti) @ (ti, H) — standard K-major layout.
    acc_ref[...] += lax.dot_general(h.astype(wd_ref.dtype), wd_ref[...],
                                    (((1,), (0,)), ((), ())),
                                    preferred_element_type=jnp.float32)

    @pl.when(k == pl.num_programs(1) - 1)
    def _():
        o_ref[...] = acc_ref[...].astype(o_ref.dtype)


def _round_up(x, m):
    return ((x + m - 1) // m) * m


def _sublane_multiple(dtype):
    return {4: 8, 2: 16, 1: 32}.get(jnp.dtype(dtype).itemsize, 8)


def _pick_divisor_tile(total, target, multiple):
    """Largest t <= min(target, total) that is a multiple of `multiple` and
    divides `total`; falls back to `total` (full-dim block) if none exists."""
    t = min(target, total)
    t = (t // multiple) * multiple
    while t >= multiple:
        if total % t == 0:
            return t
        t -= multiple
    return total


def gated_mlp(x, wg, wu, wd, *, tm=512, ti=1024, vmem_limit_bytes=None):
    """SwiGLU MLP forward: out = (swish(x @ Wg^T) * (x @ Wu^T)) @ Wd^T.

    x:      [B, T, H]
    wg, wu: [I, H]   (PyTorch nn.Linear weight layout: [out_features, in_features])
    wd:     [H, I]
    """
    B, T, H = x.shape
    I, Hw = wg.shape
    assert Hw == H and wu.shape == (I, H) and wd.shape == (H, I)

    M = B * T
    x2 = x.reshape(M, H)

    x_bytes = jnp.dtype(x.dtype).itemsize
    w_bytes = jnp.dtype(wg.dtype).itemsize
    sub = _sublane_multiple(x.dtype)

    # ---- Row tile (M axis): dtype-aware sublane rounding, no wrapper-side pad.
    tm = max(sub, min(_round_up(tm, sub), _round_up(M, sub)))
    if pl.cdiv(M, tm) == 1 and M >= 256:
        # Guarantee >= 2 row blocks so both TensorCores on v7x get work.
        tm = _round_up(pl.cdiv(M, 2), sub)
    n_m = pl.cdiv(M, tm)

    # ---- Generation-aware VMEM budget.
    try:
        vmem_cap = int(pltpu.get_tpu_info().vmem_capacity_bytes)
    except Exception:
        vmem_cap = 64 * 1024 * 1024          # conservative (v7x per-TC size)
    budget = int(vmem_limit_bytes) if vmem_limit_bytes is not None \
        else (vmem_cap * 7) // 8

    def vmem_need(tm_, ti_):
        return (2 * tm_ * H * x_bytes            # x tile (double-buffered)
                + 2 * tm_ * H * x_bytes          # out tile (double-buffered)
                + 2 * 2 * ti_ * H * w_bytes      # fused [Wg;Wu] tile (double-buffered)
                + 2 * ti_ * H * w_bytes          # Wd^T tile (double-buffered)
                + tm_ * H * 4                    # f32 accumulator scratch
                + 6 * tm_ * ti_ * 4)             # f32 gate/up/h intermediates (approx)

    # ---- Intermediate tile (k axis): lane-multiple, divides I, fits VMEM.
    ti = _pick_divisor_tile(I, ti, 128)
    while ti > 128 and vmem_need(tm, ti) > budget:
        ti = _pick_divisor_tile(I, ti - 128, 128)
    while tm > sub and vmem_need(tm, ti) > budget:
        tm = max(sub, _round_up(tm // 2, sub))
        n_m = pl.cdiv(M, tm)
    n_k = I // ti if I % ti == 0 else 1          # ti divides I or ti == I

    # ---- One-time weight preprocessing (outside the pipelined hot loop):
    #  * interleave Wg/Wu per k-tile -> single fused dot per grid step
    #  * transpose Wd to [I, H]      -> lane-dense streaming, no per-step transpose
    wgu = jnp.concatenate(
        [wg.reshape(n_k, ti, H), wu.reshape(n_k, ti, H)], axis=1
    ).reshape(2 * I, H)
    wd_t = wd.T                                  # [I, H]

    grid = (n_m, n_k)

    cost = pl.CostEstimate(
        flops=6 * M * H * I,
        transcendentals=M * I,
        bytes_accessed=(2 * M * H * x_bytes            # x read + out write
                        + n_m * 3 * I * H * w_bytes),  # weights re-streamed per row tile
    )

    out = pl.pallas_call(
        functools.partial(_gated_mlp_kernel, ti=ti),
        out_shape=jax.ShapeDtypeStruct((M, H), x.dtype),
        grid_spec=pltpu.PrefetchScalarGridSpec(
            num_scalar_prefetch=0,
            grid=grid,
            in_specs=[
                pl.BlockSpec((tm, H), lambda i, k: (i, 0)),        # x rows
                pl.BlockSpec((2 * ti, H), lambda i, k: (k, 0)),    # fused [Wg;Wu] tile
                pl.BlockSpec((ti, H), lambda i, k: (k, 0)),        # Wd^T tile
            ],
            out_specs=pl.BlockSpec((tm, H), lambda i, k: (i, 0)),
            scratch_shapes=[pltpu.VMEM((tm, H), jnp.float32)],
        ),
        compiler_params=pltpu.CompilerParams(
            dimension_semantics=("parallel", "arbitrary"),
            vmem_limit_bytes=int(min(budget, vmem_cap)),
        ),
        cost_estimate=cost,
    )(x2, wgu, wd_t)

    return out.reshape(B, T, H)


def gated_mlp_ref(x, wg, wu, wd):
    gate = jnp.einsum("bth,ih->bti", x, wg)
    y = jnp.einsum("bth,ih->bti", x, wu)
    h = gate * jax.nn.sigmoid(gate) * y
    return jnp.einsum("bti,hi->bth", h, wd)


if __name__ == "__main__":
    # Module config: hidden_size=128, hidden_ratio=4 (default)
    #   intermediate_size = int(128*4*2/3)=341 -> rounded up to 256*2 = 512
    hidden_size = 128
    intermediate_size = 256 * ((int(hidden_size * 4 * 2 / 3) + 255) // 256)  # 512

    B, T = 2, 8
    key = jax.random.PRNGKey(0)
    kx, kg, ku, kd = jax.random.split(key, 4)

    x = jax.random.normal(kx, (B, T, hidden_size), dtype=jnp.float32)
    # PyTorch nn.Linear weight layout: [out_features, in_features]
    wg = jax.random.normal(kg, (intermediate_size, hidden_size), jnp.float32) * 0.02
    wu = jax.random.normal(ku, (intermediate_size, hidden_size), jnp.float32) * 0.02
    wd = jax.random.normal(kd, (hidden_size, intermediate_size), jnp.float32) * 0.02

    # ti=256 -> two I-tiles, exercising the accumulator (init / add / writeback).
    out = gated_mlp(x, wg, wu, wd, ti=256)
    out = jax.block_until_ready(out)

    ref = gated_mlp_ref(x, wg, wu, wd)
    assert out.shape == (B, T, hidden_size)
    assert jnp.allclose(out, ref, atol=1e-4, rtol=1e-4)

    print("KERNEL_OK")
</pallas_src>

<mosaic_0001>
module attributes {stable_mosaic.version = 11 : i64} {
  func.func @_gated_mlp_kernel(%arg0: i32, %arg1: i32, %arg2: memref<16x128xf32, #tpu.memory_space<vmem>>, %arg3: memref<512x128xf32, #tpu.memory_space<vmem>>, %arg4: memref<256x128xf32, #tpu.memory_space<vmem>>, %arg5: memref<16x128xf32, #tpu.memory_space<vmem>>, %arg6: memref<16x128xf32, #tpu.memory_space<vmem>>) attributes {dimension_semantics = [#tpu.dimension_semantics<parallel>, #tpu.dimension_semantics<arbitrary>], iteration_bounds = array<i64: 1, 2>, scalar_prefetch = 0 : i64, scratch_operands = 1 : i64, tpu.core_type = #tpu.core_type<tc>, window_params = [{transform_indices = @transform_0, window_bounds = array<i64: 16, 128>}, {transform_indices = @transform_1, window_bounds = array<i64: 512, 128>}, {transform_indices = @transform_2, window_bounds = array<i64: 256, 128>}, {transform_indices = @transform_3, window_bounds = array<i64: 16, 128>}]} {
    %c0_i32 = arith.constant 0 : i32
    %0 = arith.cmpi eq, %arg1, %c0_i32 : i32
    %1 = arith.extui %0 : i1 to i32
    %c0_i32_0 = arith.constant 0 : i32
    %2 = arith.cmpi ne, %1, %c0_i32_0 : i32
    scf.if %2 {
      %cst_13 = arith.constant 0.000000e+00 : f32
      %23 = vector.broadcast %cst_13 : f32 to vector<16x128xf32>
      %c0_14 = arith.constant 0 : index
      %c0_15 = arith.constant 0 : index
      %24 = vector.load %arg6[%c0_14, %c0_15] : memref<16x128xf32, #tpu.memory_space<vmem>>, vector<16x128xf32>
      tpu.vector_store %arg6[%c0_14, %c0_15], %23 {strides = array<i32>} : memref<16x128xf32, #tpu.memory_space<vmem>>, vector<16x128xf32>,
    } else {
    }
    %c0 = arith.constant 0 : index
    %c0_1 = arith.constant 0 : index
    %3 = vector.load %arg2[%c0, %c0_1] : memref<16x128xf32, #tpu.memory_space<vmem>>, vector<16x128xf32>
    %c0_2 = arith.constant 0 : index
    %c0_3 = arith.constant 0 : index
    %4 = vector.load %arg3[%c0_2, %c0_3] : memref<512x128xf32, #tpu.memory_space<vmem>>, vector<512x128xf32>
    %cst = arith.constant dense<0.000000e+00> : vector<16x512xf32>
    %5 = tpu.matmul %3, %4, %cst {dimension_numbers = #tpu.dot_dimension_numbers<[1], [1], [0], [0], [0, 0, 1, 0], [], []>} : vector<16x128xf32>, vector<512x128xf32>, vector<16x512xf32> -> vector<16x512xf32>
    %6 = vector.extract_strided_slice %5 {offsets = [0, 0], sizes = [16, 256], strides = [1, 1]} : vector<16x512xf32> to vector<16x256xf32>
    %7 = vector.extract_strided_slice %5 {offsets = [0, 256], sizes = [16, 256], strides = [1, 1]} : vector<16x512xf32> to vector<16x256xf32>
    %8 = arith.negf %6 : vector<16x256xf32>
    %9 = math.exp %8 : vector<16x256xf32>
    %cst_4 = arith.constant 1.000000e+00 : f32
    %10 = vector.broadcast %cst_4 : f32 to vector<16x256xf32>
    %11 = arith.addf %10, %9 : vector<16x256xf32>
    %12 = arith.divf %10, %11 : vector<16x256xf32>
    %13 = arith.mulf %6, %12 : vector<16x256xf32>
    %14 = arith.mulf %13, %7 : vector<16x256xf32>
    %c0_5 = arith.constant 0 : index
    %c0_6 = arith.constant 0 : index
    %15 = vector.load %arg6[%c0_5, %c0_6] : memref<16x128xf32, #tpu.memory_space<vmem>>, vector<16x128xf32>
    %c0_7 = arith.constant 0 : index
    %c0_8 = arith.constant 0 : index
    %16 = vector.load %arg4[%c0_7, %c0_8] : memref<256x128xf32, #tpu.memory_space<vmem>>, vector<256x128xf32>
    %cst_9 = arith.constant dense<0.000000e+00> : vector<16x128xf32>
    %17 = tpu.matmul %14, %16, %cst_9 {dimension_numbers = #tpu.dot_dimension_numbers<[1], [0], [0], [1], [0, 0, 1, 1], [], []>} : vector<16x256xf32>, vector<256x128xf32>, vector<16x128xf32> -> vector<16x128xf32>
    %18 = arith.addf %15, %17 : vector<16x128xf32>
    %c0_10 = arith.constant 0 : index
    %c0_11 = arith.constant 0 : index
    %19 = vector.load %arg6[%c0_10, %c0_11] : memref<16x128xf32, #tpu.memory_space<vmem>>, vector<16x128xf32>
    tpu.vector_store %arg6[%c0_10, %c0_11], %18 {strides = array<i32>} : memref<16x128xf32, #tpu.memory_space<vmem>>, vector<16x128xf32>,
    %c1_i32 = arith.constant 1 : i32
    %20 = arith.cmpi eq, %arg1, %c1_i32 : i32
    %21 = arith.extui %20 : i1 to i32
    %c0_i32_12 = arith.constant 0 : i32
    %22 = arith.cmpi ne, %21, %c0_i32_12 : i32
    scf.if %22 {
      %c0_13 = arith.constant 0 : index
      %c0_14 = arith.constant 0 : index
      %23 = vector.load %arg6[%c0_13, %c0_14] : memref<16x128xf32, #tpu.memory_space<vmem>>, vector<16x128xf32>
      %c0_15 = arith.constant 0 : index
      %c0_16 = arith.constant 0 : index
      %24 = vector.load %arg5[%c0_15, %c0_16] : memref<16x128xf32, #tpu.memory_space<vmem>>, vector<16x128xf32>
      tpu.vector_store %arg5[%c0_15, %c0_16], %23 {strides = array<i32>} : memref<16x128xf32, #tpu.memory_space<vmem>>, vector<16x128xf32>,
    } else {
    }
    return
  }
  func.func @transform_0(%arg0: i32, %arg1: i32) -> (i32, i32) {
    %c0_i32 = arith.constant 0 : i32
    %c0_i32_0 = arith.constant 0 : i32
    return %arg0, %c0_i32 : i32, i32
  }
  func.func @transform_1(%arg0: i32, %arg1: i32) -> (i32, i32) {
    %c0_i32 = arith.constant 0 : i32
    %c0_i32_0 = arith.constant 0 : i32
    return %arg1, %c0_i32 : i32, i32
  }
  func.func @transform_2(%arg0: i32, %arg1: i32) -> (i32, i32) {
    %c0_i32 = arith.constant 0 : i32
    %c0_i32_0 = arith.constant 0 : i32
    return %arg1, %c0_i32 : i32, i32
  }
  func.func @transform_3(%arg0: i32, %arg1: i32) -> (i32, i32) {
    %c0_i32 = arith.constant 0 : i32
    %c0_i32_0 = arith.constant 0 : i32
    return %arg0, %c0_i32 : i32, i32
  }
}

</mosaic_0001>

<llo_original>
// kernel: tpu_custom_call.1
$region0: #{tpu_custom_call.1}
  #allocation0 [shape = 'u32[]', space=smem, size = 0x4, offset = 0x4, fixed_abs, tag = 'smem constant byte address 0x4 - core index']
  #allocation1 [shape = 'u32[72,128]{1,0:T(1,128)}', space=vmem, size = 0x9000, scoped, tag = 'internal scratch']
  #allocation2 [shape = 'f32[16,128]{1,0:T(8,128)}', space=vmem, size = 0x2000, scoped, tag = 'scratch operand']
  %s0 = inlined_call_operand.hbm [shape: f32[16,128], index: 0, kind: input, shape index: {}]
  %s1 = inlined_call_operand.hbm [shape: f32[1024,128], index: 1, kind: input, shape index: {}]
  %s2 = inlined_call_operand.hbm [shape: f32[512,128], index: 2, kind: input, shape index: {}]
  %s3 = inlined_call_operand.hbm [shape: f32[16,128], index: 3, kind: output, shape index: {}]
  %s4 = sld [smem:[#allocation0]]
  $region65: #{tpu_custom_call.1} parent=0
    _
  %s6 = ssub.s32 1, %s4
  %s7 = scalar_select 0, %s6, %s4
  $region1: #{tpu_custom_call.1} parent=0
    #allocation3 [shape = 'u8[8192]{0}', space=vmem, size = 0x2000, scoped, tag = 'input window, operand 0, single buffered']
    #allocation4 [shape = 's32[2]{0}', space=sflag, size = 0x8, scoped, tag = 'scoped memory for tpu_custom_call.1']
    #allocation5 [shape = 's32[2]{0}', space=sflag, size = 0x8, scoped, tag = 'scoped memory for tpu_custom_call.1']
    #allocation6 [shape = 'u8[524288]{0}', space=vmem, size = 0x80000, scoped, tag = 'input window, operand 1']
    #allocation7 [shape = 's32[2]{0}', space=sflag, size = 0x8, scoped, tag = 'scoped memory for tpu_custom_call.1']
    #allocation8 [shape = 'u8[262144]{0}', space=vmem, size = 0x40000, scoped, tag = 'input window, operand 2']
    #allocation9 [shape = 'u8[8192]{0}', space=vmem, size = 0x2000, scoped, tag = 'output window, operand 0, single buffered']
    %8 = vsyncpa [#allocation4], 0
    %9 = vsyncpa [#allocation7], 0
    %s10 = scalar_lea.sflag [#allocation7], 1
    %11 = vsyncpa %s10, 0
    %12 = vsyncpa [#allocation5], 0
    loop: start=0, step=1, limit=4
    $region2: #{tpu_custom_call.1} parent=1 // loop_pre_header
      _
    $region3: #{tpu_custom_call.1} parent=1 // loop_header
      %s14 = sphi 0, %s18
      %p15 = scmp.ge.s32.totalorder %s14, 4
      %s21 = sphi 0, %s33
      %s22 = sphi 0, %s29
      %s23 = sphi 0, %s21
      %s24 = sphi 0, %s22
      %s25 = sphi 0, %s23
      %s26 = sphi 0, %s24
      %s36 = sphi 0, %s38
      %s39 = sphi 0, %s36
      %s40 = sphi 0, %s39
      %s56 = sphi 0, %s40
      %s62 = sphi 0, %s64
      %s65 = sphi 0, %s62
      %s66 = sphi 0, %s65
      %s82 = sphi 0, %s66
      %s88 = sphi 0, %s90
      %s91 = sphi 0, %s88
      %s92 = sphi 0, %s91
      %s108 = sphi 0, %s92
      %s114 = sphi 0, %s116
      %s117 = sphi 0, %s114
      %s118 = sphi 0, %s117
      %s134 = sphi 0, %s118
    $region4: #{tpu_custom_call.1} parent=1 // loop_header_branch
      %17 = sbr.rel (%p15) target = $region8
    $region5: #{tpu_custom_call.1} parent=1 // loop_body
      %s19 = ssub.s32 %s14, 1
      %s20 = ssub.s32 %s14, 2
      %s27 = sadd.s32 1, %s22
      %p28 = scmp.ge.s32.totalorder %s27, 2
      %s29 = scalar_select %p28, 0, %s27
      %s30 = sadd.s32 1, %s21
      %s31 = scalar_select %p28, %s30, %s21
      %p32 = scmp.ge.s32.totalorder %s31, 1
      %s33 = scalar_select %p32, 0, %s31
      %s34 = ssub.s32 %s21, %s33
      %p35 = scmp.eq.s32.totalorder %s34, 0
      %s37 = sadd.s32 %s36, 1
      %s38 = scalar_select %p35, %s36, %s37
      %p41 = pneg %p35
      %p42 = scmp.eq.s32.totalorder %s14, 1
      %p43 = por %p41, %p42
      %p44 = scmp.ne.s32.totalorder %s36, %s39
      %p45 = scmp.eq.s32.totalorder %s14, 0
      %p46 = por %p44, %p45
      %p47 = scmp.ne.s32.totalorder %s36, %s39
      %p48 = scmp.eq.s32.totalorder %s19, 1
      %p49 = por %p47, %p48
      %p50 = scmp.ne.s32.totalorder %s39, %s40
      %p51 = scmp.eq.s32.totalorder %s19, 0
      %p52 = por %p50, %p51
      %p53 = scmp.ne.s32.totalorder %s39, %s40
      %p54 = scmp.eq.s32.totalorder %s20, 1
      %p55 = por %p53, %p54
      %p57 = scmp.ne.s32.totalorder %s40, %s56
      %p58 = scmp.eq.s32.totalorder %s20, 0
      %p59 = por %p57, %p58
      %s60 = ssub.s32 %s22, %s29
      %p61 = scmp.eq.s32.totalorder %s60, 0
      %s63 = sadd.s32 %s62, 1
      %s64 = scalar_select %p61, %s62, %s63
      %p67 = pneg %p61
      %p68 = scmp.eq.s32.totalorder %s14, 1
      %p69 = por %p67, %p68
      %p70 = scmp.ne.s32.totalorder %s62, %s65
      %p71 = scmp.eq.s32.totalorder %s14, 0
      %p72 = por %p70, %p71
      %p73 = scmp.ne.s32.totalorder %s62, %s65
      %p74 = scmp.eq.s32.totalorder %s19, 1
      %p75 = por %p73, %p74
      %p76 = scmp.ne.s32.totalorder %s65, %s66
      %p77 = scmp.eq.s32.totalorder %s19, 0
      %p78 = por %p76, %p77
      %p79 = scmp.ne.s32.totalorder %s65, %s66
      %p80 = scmp.eq.s32.totalorder %s20, 1
      %p81 = por %p79, %p80
      %p83 = scmp.ne.s32.totalorder %s66, %s82
      %p84 = scmp.eq.s32.totalorder %s20, 0
      %p85 = por %p83, %p84
      %s86 = ssub.s32 %s22, %s29
      %p87 = scmp.eq.s32.totalorder %s86, 0
      %s89 = sadd.s32 %s88, 1
      %s90 = scalar_select %p87, %s88, %s89
      %p93 = pneg %p87
      %p94 = scmp.eq.s32.totalorder %s14, 1
      %p95 = por %p93, %p94
      %p96 = scmp.ne.s32.totalorder %s88, %s91
      %p97 = scmp.eq.s32.totalorder %s14, 0
      %p98 = por %p96, %p97
      %p99 = scmp.ne.s32.totalorder %s88, %s91
      %p100 = scmp.eq.s32.totalorder %s19, 1
      %p101 = por %p99, %p100
      %p102 = scmp.ne.s32.totalorder %s91, %s92
      %p103 = scmp.eq.s32.totalorder %s19, 0
      %p104 = por %p102, %p103
      %p105 = scmp.ne.s32.totalorder %s91, %s92
      %p106 = scmp.eq.s32.totalorder %s20, 1
      %p107 = por %p105, %p106
      %p109 = scmp.ne.s32.totalorder %s92, %s108
      %p110 = scmp.eq.s32.totalorder %s20, 0
      %p111 = por %p109, %p110
      %s112 = ssub.s32 %s21, %s33
      %p113 = scmp.eq.s32.totalorder %s112, 0
      %s115 = sadd.s32 %s114, 1
      %s116 = scalar_select %p113, %s114, %s115
      %p119 = pneg %p113
      %p120 = scmp.eq.s32.totalorder %s14, 1
      %p121 = por %p119, %p120
      %p122 = scmp.ne.s32.totalorder %s114, %s117
      %p123 = scmp.eq.s32.totalorder %s14, 0
      %p124 = por %p122, %p123
      %p125 = scmp.ne.s32.totalorder %s114, %s117
      %p126 = scmp.eq.s32.totalorder %s19, 1
      %p127 = por %p125, %p126
      %p128 = scmp.ne.s32.totalorder %s117, %s118
      %p129 = scmp.eq.s32.totalorder %s19, 0
      %p130 = por %p128, %p129
      %p131 = scmp.ne.s32.totalorder %s117, %s118
      %p132 = scmp.eq.s32.totalorder %s20, 1
      %p133 = por %p131, %p132
      %p135 = scmp.ne.s32.totalorder %s118, %s134
      %p136 = scmp.eq.s32.totalorder %s20, 0
      %p137 = por %p135, %p136
      %p138 = scmp.le.s32.totalorder 1, %s14
      %p139 = scmp.lt.s32.totalorder %s14, 3
      %p140 = pnand %p138, %p139
      %p141 = pneg %p140
      // Predicated region
      $region9: #{tpu_custom_call.1} parent=5 // pred_check
        _
      $region10: #{tpu_custom_call.1} parent=5 // pred_check_branch
        %143 = sbr.rel (%p140) target = $region12
      $region11: #{tpu_custom_call.1} parent=5 // pred_region
        %s144 = ssub.s32 %s14, 1
        // Predicated region
        $region13: #{tpu_custom_call.1} parent=11 // pred_check
          %p145 = pneg %p52
        $region14: #{tpu_custom_call.1} parent=11 // pred_check_branch
          %147 = sbr.rel (%p145) target = $region16
        $region15: #{tpu_custom_call.1} parent=11 // pred_region
          %s148 = smul.u32 2, %s23
          %150 = vsyncadd [#allocation4], 0
          %s151 = smul.addr %s148, 8
          %s152 = scalar_lea.hbm %s0, %s151
          %s153 = sshll.u32 %s152, 4
          %s154 = int_to_ptr.hbm [resolvable:$true] %s153
          %s155 = sshll.u32 [#allocation3], 4
          %s156 = int_to_ptr.vmem [resolvable:$true] %s155
          %161 = dma.hbm_to_vmem [thread:$0]  %s154, 256, %s156, [#allocation4], 128, 128, 8
        $region16: #{tpu_custom_call.1} parent=11 // pred_fallthru
          _
      $region12: #{tpu_custom_call.1} parent=5 // pred_fallthru
        _
      %p162 = scmp.lt.s32.totalorder %s14, 2
      // Predicated region
      $region17: #{tpu_custom_call.1} parent=5 // pred_check
        %p163 = pneg %p162
      $region18: #{tpu_custom_call.1} parent=5 // pred_check_branch
        %165 = sbr.rel (%p163) target = $region20
      $region19: #{tpu_custom_call.1} parent=5 // pred_region
        // Predicated region
        $region21: #{tpu_custom_call.1} parent=19 // pred_check
          %p166 = pneg %p72
        $region22: #{tpu_custom_call.1} parent=19 // pred_check_branch
          %168 = sbr.rel (%p166) target = $region24
        $region23: #{tpu_custom_call.1} parent=19 // pred_region
          %s169 = sand.u32 %s14, 1
          %s170 = scalar_lea.sflag [#allocation7], %s169
          %s171 = sand.u32 %s62, 1
          %s172 = smul.addr %s171, 512
          %s173 = scalar_lea.vmem [#allocation6], %s172
          %s174 = smul.u32 64, %s22
          %176 = vsyncadd %s170, 0
          %s177 = smul.addr %s174, 8
          %s178 = scalar_lea.hbm %s1, %s177
          %s179 = sshll.u32 %s178, 4
          %s180 = int_to_ptr.hbm [resolvable:$true] %s179
          %s181 = sshll.u32 %s173, 4
          %s182 = int_to_ptr.vmem [resolvable:$true] %s181
          %187 = dma.hbm_to_vmem [thread:$0]  %s180, 8192, %s182, %s170, 128, 128, 8
        $region24: #{tpu_custom_call.1} parent=19 // pred_fallthru
          _
        // Predicated region
        $region25: #{tpu_custom_call.1} parent=19 // pred_check
          %p188 = pneg %p98
        $region26: #{tpu_custom_call.1} parent=19 // pred_check_branch
          %190 = sbr.rel (%p188) target = $region28
        $region27: #{tpu_custom_call.1} parent=19 // pred_region
          %s191 = sand.u32 %s14, 1
          %s192 = scalar_lea.sflag [#allocation7], %s191
          %s193 = sand.u32 %s88, 1
          %s194 = smul.addr %s193, 256
          %s195 = scalar_lea.vmem [#allocation8], %s194
          %s196 = smul.u32 32, %s22
          %198 = vsyncadd %s192, 0
          %s199 = smul.addr %s196, 8
          %s200 = scalar_lea.hbm %s2, %s199
          %s201 = sshll.u32 %s200, 4
          %s202 = int_to_ptr.hbm [resolvable:$true] %s201
          %s203 = sshll.u32 %s195, 4
          %s204 = int_to_ptr.vmem [resolvable:$true] %s203
          %209 = dma.hbm_to_vmem [thread:$0]  %s202, 4096, %s204, %s192, 128, 128, 8
        $region28: #{tpu_custom_call.1} parent=19 // pred_fallthru
          _
      $region20: #{tpu_custom_call.1} parent=5 // pred_fallthru
        _
      %p210 = scmp.le.s32.totalorder 1, %s14
      %p211 = scmp.lt.s32.totalorder %s14, 3
      %p212 = pnand %p210, %p211
      %p213 = pneg %p212
      // Predicated region
      $region29: #{tpu_custom_call.1} parent=5 // pred_check
        _
      $region30: #{tpu_custom_call.1} parent=5 // pred_check_branch
        %215 = sbr.rel (%p212) target = $region32
      $region31: #{tpu_custom_call.1} parent=5 // pred_region
        %s216 = ssub.s32 %s14, 1
        // Predicated region
        $region33: #{tpu_custom_call.1} parent=31 // pred_check
          %p217 = pneg %p52
        $region34: #{tpu_custom_call.1} parent=31 // pred_check_branch
          %219 = sbr.rel (%p217) target = $region36
        $region35: #{tpu_custom_call.1} parent=31 // pred_region
          %221 = dma.done [#allocation4], 256
        $region36: #{tpu_custom_call.1} parent=31 // pred_fallthru
          _
        %s222 = sand.u32 %s19, 1
        %s223 = scalar_lea.sflag [#allocation7], %s222
        %s224 = sand.u32 %s65, 1
        %s225 = smul.addr %s224, 512
        %s226 = scalar_lea.vmem [#allocation6], %s225
        // Predicated region
        $region37: #{tpu_custom_call.1} parent=31 // pred_check
          %p227 = pneg %p78
        $region38: #{tpu_custom_call.1} parent=31 // pred_check_branch
          %229 = sbr.rel (%p227) target = $region40
        $region39: #{tpu_custom_call.1} parent=31 // pred_region
          %231 = dma.done %s223, 8192
        $region40: #{tpu_custom_call.1} parent=31 // pred_fallthru
          _
        %s232 = sand.u32 %s19, 1
        %s233 = scalar_lea.sflag [#allocation7], %s232
        %s234 = sand.u32 %s91, 1
        %s235 = smul.addr %s234, 256
        %s236 = scalar_lea.vmem [#allocation8], %s235
        // Predicated region
        $region41: #{tpu_custom_call.1} parent=31 // pred_check
          %p237 = pneg %p104
        $region42: #{tpu_custom_call.1} parent=31 // pred_check_branch
          %239 = sbr.rel (%p237) target = $region44
        $region43: #{tpu_custom_call.1} parent=31 // pred_region
          %241 = dma.done %s233, 4096
        $region44: #{tpu_custom_call.1} parent=31 // pred_fallthru
          _
        %p242 = pneg %p52
        %p243 = pneg %p49
        %s244 = sand.u32 %s19, 1
        %s245 = scalar_lea.sflag [#allocation7], %s244
        %s246 = sand.u32 %s65, 1
        %s247 = smul.addr %s246, 512
        %s248 = scalar_lea.vmem [#allocation6], %s247
        %p249 = pneg %p78
        %p250 = pneg %p75
        %s251 = sand.u32 %s19, 1
        %s252 = scalar_lea.sflag [#allocation7], %s251
        %s253 = sand.u32 %s91, 1
        %s254 = smul.addr %s253, 256
        %s255 = scalar_lea.vmem [#allocation8], %s254
        %p256 = pneg %p104
        %p257 = pneg %p101
        %p258 = pneg %p130
        %p259 = pneg %p127
        %s260 = smul.u32 2, %s23
        %s261 = smul.u32 64, %s24
        %s262 = smul.u32 32, %s24
        %s263 = smul.u32 2, %s23
        %p264 = scmp.eq.s32.totalorder %s24, 0
        // Predicated region
        $region45: #{tpu_custom_call.1} parent=31 // pred_check
          %p265 = pneg %p264
        $region46: #{tpu_custom_call.1} parent=31 // pred_check_branch
          %267 = sbr.rel (%p265) target = $region48
        $region47: #{tpu_custom_call.1} parent=31 // pred_region
          %268 = vst [vmem:[#allocation2] sm:$0xff] 0.0
          %269 = vst [vmem:[#allocation2 + $0x8] sm:$0xff] 0.0
        $region48: #{tpu_custom_call.1} parent=31 // pred_fallthru
          _
        %v270 = vld [vmem:[#allocation3] sm:$0xff]
        %v271 = vld [vmem:[#allocation3 + $0x8] sm:$0xff]
        %v272 = vld [vmem:[%s226] sm:$0xff]
        %v273 = vld [vmem:[%s226 + $0x8] sm:$0xff]
        %v274 = vld [vmem:[%s226 + $0x10] sm:$0xff]
        %v275 = vld [vmem:[%s226 + $0x18] sm:$0xff]
        %v276 = vld [vmem:[%s226 + $0x20] sm:$0xff]
        %v277 = vld [vmem:[%s226 + $0x28] sm:$0xff]
        %v278 = vld [vmem:[%s226 + $0x30] sm:$0xff]
        %v279 = vld [vmem:[%s226 + $0x38] sm:$0xff]
        %v280 = vld [vmem:[%s226 + $0x40] sm:$0xff]
        %v281 = vld [vmem:[%s226 + $0x48] sm:$0xff]
        %v282 = vld [vmem:[%s226 + $0x50] sm:$0xff]
        %v283 = vld [vmem:[%s226 + $0x58] sm:$0xff]
        %v284 = vld [vmem:[%s226 + $0x60] sm:$0xff]
        %v285 = vld [vmem:[%s226 + $0x68] sm:$0xff]
        %v286 = vld [vmem:[%s226 + $0x70] sm:$0xff]
        %v287 = vld [vmem:[%s226 + $0x78] sm:$0xff]
        %v288 = vld [vmem:[%s226 + $0x80] sm:$0xff]
        %v289 = vld [vmem:[%s226 + $0x88] sm:$0xff]
        %v290 = vld [vmem:[%s226 + $0x90] sm:$0xff]
        %v291 = vld [vmem:[%s226 + $0x98] sm:$0xff]
        %v292 = vld [vmem:[%s226 + $0xa0] sm:$0xff]
        %v293 = vld [vmem:[%s226 + $0xa8] sm:$0xff]
        %v294 = vld [vmem:[%s226 + $0xb0] sm:$0xff]
        %v295 = vld [vmem:[%s226 + $0xb8] sm:$0xff]
        %v296 = vld [vmem:[%s226 + $0xc0] sm:$0xff]
        %v297 = vld [vmem:[%s226 + $0xc8] sm:$0xff]
        %v298 = vld [vmem:[%s226 + $0xd0] sm:$0xff]
        %v299 = vld [vmem:[%s226 + $0xd8] sm:$0xff]
        %v300 = vld [vmem:[%s226 + $0xe0] sm:$0xff]
        %v301 = vld [vmem:[%s226 + $0xe8] sm:$0xff]
        %v302 = vld [vmem:[%s226 + $0xf0] sm:$0xff]
        %v303 = vld [vmem:[%s226 + $0xf8] sm:$0xff]
        %v304 = vld [vmem:[%s226 + $0x100] sm:$0xff]
        %v305 = vld [vmem:[%s226 + $0x108] sm:$0xff]
        %v306 = vld [vmem:[%s226 + $0x110] sm:$0xff]
        %v307 = vld [vmem:[%s226 + $0x118] sm:$0xff]
        %v308 = vld [vmem:[%s226 + $0x120] sm:$0xff]
        %v309 = vld [vmem:[%s226 + $0x128] sm:$0xff]
        %v310 = vld [vmem:[%s226 + $0x130] sm:$0xff]
        %v311 = vld [vmem:[%s226 + $0x138] sm:$0xff]
        %v312 = vld [vmem:[%s226 + $0x140] sm:$0xff]
        %v313 = vld [vmem:[%s226 + $0x148] sm:$0xff]
        %v314 = vld [vmem:[%s226 + $0x150] sm:$0xff]
        %v315 = vld [vmem:[%s226 + $0x158] sm:$0xff]
        %v316 = vld [vmem:[%s226 + $0x160] sm:$0xff]
        %v317 = vld [vmem:[%s226 + $0x168] sm:$0xff]
        %v318 = vld [vmem:[%s226 + $0x170] sm:$0xff]
        %v319 = vld [vmem:[%s226 + $0x178] sm:$0xff]
        %v320 = vld [vmem:[%s226 + $0x180] sm:$0xff]
        %v321 = vld [vmem:[%s226 + $0x188] sm:$0xff]
        %v322 = vld [vmem:[%s226 + $0x190] sm:$0xff]
        %v323 = vld [vmem:[%s226 + $0x198] sm:$0xff]
        %v324 = vld [vmem:[%s226 + $0x1a0] sm:$0xff]
        %v325 = vld [vmem:[%s226 + $0x1a8] sm:$0xff]
        %v326 = vld [vmem:[%s226 + $0x1b0] sm:$0xff]
        %v327 = vld [vmem:[%s226 + $0x1b8] sm:$0xff]
        %v328 = vld [vmem:[%s226 + $0x1c0] sm:$0xff]
        %v329 = vld [vmem:[%s226 + $0x1c8] sm:$0xff]
        %v330 = vld [vmem:[%s226 + $0x1d0] sm:$0xff]
        %v331 = vld [vmem:[%s226 + $0x1d8] sm:$0xff]
        %v332 = vld [vmem:[%s226 + $0x1e0] sm:$0xff]
        %v333 = vld [vmem:[%s226 + $0x1e8] sm:$0xff]
        %v334 = vld [vmem:[%s226 + $0x1f0] sm:$0xff]
        %v335 = vld [vmem:[%s226 + $0x1f8] sm:$0xff]
        %336 = vmatpush.xpose.msra.mxu0 %v287
        %337 = vmatpush.xpose.msra.mxu0 %v286
        %338 = vmatpush.xpose.msra.mxu0 %v285
        %339 = vmatpush.xpose.msra.mxu0 %v284
        %340 = vmatpush.xpose.msra.mxu0 %v283
        %341 = vmatpush.xpose.msra.mxu0 %v282
        %342 = vmatpush.xpose.msra.mxu0 %v281
        %343 = vmatpush.xpose.msra.mxu0 %v280
        %344 = vmatpush.xpose.msra.mxu0 %v279
        %345 = vmatpush.xpose.msra.mxu0 %v278
        %346 = vmatpush.xpose.msra.mxu0 %v277
        %347 = vmatpush.xpose.msra.mxu0 %v276
        %348 = vmatpush.xpose.msra.mxu0 %v275
        %349 = vmatpush.xpose.msra.mxu0 %v274
        %350 = vmatpush.xpose.msra.mxu0 %v273
        %351 = vmatpush.xpose.msra.mxu0 %v272
        %352 = vmatmul.f32.gmra.mxu0 %v270
        %v353 = vpop.f32.mrf.mxu0
        %v354 = vadd.f32 0.0, %v353
        %355 = vmatmul.f32.gmra.mxu0 %v271
        %v356 = vpop.f32.mrf.mxu0
        %v357 = vadd.f32 0.0, %v356
        %358 = vdwg.mxu0
        %359 = vmatpush.xpose.msra.mxu0 %v303
        %360 = vmatpush.xpose.msra.mxu0 %v302
        %361 = vmatpush.xpose.msra.mxu0 %v301
        %362 = vmatpush.xpose.msra.mxu0 %v300
        %363 = vmatpush.xpose.msra.mxu0 %v299
        %364 = vmatpush.xpose.msra.mxu0 %v298
        %365 = vmatpush.xpose.msra.mxu0 %v297
        %366 = vmatpush.xpose.msra.mxu0 %v296
        %367 = vmatpush.xpose.msra.mxu0 %v295
        %368 = vmatpush.xpose.msra.mxu0 %v294
        %369 = vmatpush.xpose.msra.mxu0 %v293
        %370 = vmatpush.xpose.msra.mxu0 %v292
        %371 = vmatpush.xpose.msra.mxu0 %v291
        %372 = vmatpush.xpose.msra.mxu0 %v290
        %373 = vmatpush.xpose.msra.mxu0 %v289
        %374 = vmatpush.xpose.msra.mxu0 %v288
        %375 = vmatmul.f32.gmra.mxu0 %v270
        %v376 = vpop.f32.mrf.mxu0
        %v377 = vadd.f32 0.0, %v376
        %378 = vmatmul.f32.gmra.mxu0 %v271
        %v379 = vpop.f32.mrf.mxu0
        %v380 = vadd.f32 0.0, %v379
        %381 = vdwg.mxu0
        %382 = vmatpush.xpose.msra.mxu0 %v319
        %383 = vmatpush.xpose.msra.mxu0 %v318
        %384 = vmatpush.xpose.msra.mxu0 %v317
        %385 = vmatpush.xpose.msra.mxu0 %v316
        %386 = vmatpush.xpose.msra.mxu0 %v315
        %387 = vmatpush.xpose.msra.mxu0 %v314
        %388 = vmatpush.xpose.msra.mxu0 %v313
        %389 = vmatpush.xpose.msra.mxu0 %v312
        %390 = vmatpush.xpose.msra.mxu0 %v311
        %391 = vmatpush.xpose.msra.mxu0 %v310
        %392 = vmatpush.xpose.msra.mxu0 %v309
        %393 = vmatpush.xpose.msra.mxu0 %v308
        %394 = vmatpush.xpose.msra.mxu0 %v307
        %395 = vmatpush.xpose.msra.mxu0 %v306
        %396 = vmatpush.xpose.msra.mxu0 %v305
        %397 = vmatpush.xpose.msra.mxu0 %v304
        %398 = vmatmul.f32.gmra.mxu0 %v270
        %v399 = vpop.f32.mrf.mxu0
        %v400 = vadd.f32 0.0, %v399
        %401 = vmatmul.f32.gmra.mxu0 %v271
        %v402 = vpop.f32.mrf.mxu0
        %v403 = vadd.f32 0.0, %v402
        %404 = vdwg.mxu0
        %405 = vmatpush.xpose.msra.mxu0 %v335
        %406 = vmatpush.xpose.msra.mxu0 %v334
        %407 = vmatpush.xpose.msra.mxu0 %v333
        %408 = vmatpush.xpose.msra.mxu0 %v332
        %409 = vmatpush.xpose.msra.mxu0 %v331
        %410 = vmatpush.xpose.msra.mxu0 %v330
        %411 = vmatpush.xpose.msra.mxu0 %v329
        %412 = vmatpush.xpose.msra.mxu0 %v328
        %413 = vmatpush.xpose.msra.mxu0 %v327
        %414 = vmatpush.xpose.msra.mxu0 %v326
        %415 = vmatpush.xpose.msra.mxu0 %v325
        %416 = vmatpush.xpose.msra.mxu0 %v324
        %417 = vmatpush.xpose.msra.mxu0 %v323
        %418 = vmatpush.xpose.msra.mxu0 %v322
        %419 = vmatpush.xpose.msra.mxu0 %v321
        %420 = vmatpush.xpose.msra.mxu0 %v320
        %421 = vmatmul.f32.gmra.mxu0 %v270
        %v422 = vpop.f32.mrf.mxu0
        %v423 = vadd.f32 0.0, %v422
        %424 = vmatmul.f32.gmra.mxu0 %v271
        %v425 = vpop.f32.mrf.mxu0
        %v426 = vadd.f32 0.0, %v425
        %427 = vdwg.mxu0
        %v428 = vxor.u32 %v354, 2147483648
        %v429 = vxor.u32 %v377, 2147483648
        %v430 = vxor.u32 %v357, 2147483648
        %v431 = vxor.u32 %v380, 2147483648
        %v432 = vmul.f32 %v428, 1.442695
        %v433 = vpow.pop %v432
        %v434 = vmul.f32 %v429, 1.442695
        %v435 = vpow.pop %v434
        %v436 = vmul.f32 %v430, 1.442695
        %v437 = vpow.pop %v436
        %v438 = vmul.f32 %v431, 1.442695
        %v439 = vpow.pop %v438
        %v440 = vadd.f32 %v433, 1.0
        %v441 = vadd.f32 %v435, 1.0
        %v442 = vadd.f32 %v437, 1.0
        %v443 = vadd.f32 %v439, 1.0
        %v444 = vrcp.pop %v440
        %v445 = vmul.f32 %v440, %v444
        %v446 = vsub.f32 1.0, %v445
        %v447 = vmul.f32 %v444, %v446
        %v448 = vadd.f32 %v444, %v447
        %vm449 = vweird.f32 %v440
        %vm450 = vweird.f32 %v444
        %vm451 = vmor %vm449, %vm450
        %v452 = vsel %vm451, %v444, %v448
        %v453 = vand.u32 2147483647, %v440
        %vm454 = vcmp.eq.f32.partialorder %v453, 8.507059e+37
        %v455 = vand.u32 %v440, 2147483648
        %v456 = vor.u32 1.1754944e-38, %v455
        %v457 = vsel %vm454, %v456, %v452
        %v458 = vmul.f32 1.0, %v457
        %v459 = vrcp.pop %v441
        %v460 = vmul.f32 %v441, %v459
        %v461 = vsub.f32 1.0, %v460
        %v462 = vmul.f32 %v459, %v461
        %v463 = vadd.f32 %v459, %v462
        %vm464 = vweird.f32 %v441
        %vm465 = vweird.f32 %v459
        %vm466 = vmor %vm464, %vm465
        %v467 = vsel %vm466, %v459, %v463
        %v468 = vand.u32 2147483647, %v441
        %vm469 = vcmp.eq.f32.partialorder %v468, 8.507059e+37
        %v470 = vand.u32 %v441, 2147483648
        %v471 = vor.u32 1.1754944e-38, %v470
        %v472 = vsel %vm469, %v471, %v467
        %v473 = vmul.f32 1.0, %v472
        %v474 = vrcp.pop %v442
        %v475 = vmul.f32 %v442, %v474
        %v476 = vsub.f32 1.0, %v475
        %v477 = vmul.f32 %v474, %v476
        %v478 = vadd.f32 %v474, %v477
        %vm479 = vweird.f32 %v442
        %vm480 = vweird.f32 %v474
        %vm481 = vmor %vm479, %vm480
        %v482 = vsel %vm481, %v474, %v478
        %v483 = vand.u32 2147483647, %v442
        %vm484 = vcmp.eq.f32.partialorder %v483, 8.507059e+37
        %v485 = vand.u32 %v442, 2147483648
        %v486 = vor.u32 1.1754944e-38, %v485
        %v487 = vsel %vm484, %v486, %v482
        %v488 = vmul.f32 1.0, %v487
        %v489 = vrcp.pop %v443
        %v490 = vmul.f32 %v443, %v489
        %v491 = vsub.f32 1.0, %v490
        %v492 = vmul.f32 %v489, %v491
        %v493 = vadd.f32 %v489, %v492
        %vm494 = vweird.f32 %v443
        %vm495 = vweird.f32 %v489
        %vm496 = vmor %vm494, %vm495
        %v497 = vsel %vm496, %v489, %v493
        %v498 = vand.u32 2147483647, %v443
        %vm499 = vcmp.eq.f32.partialorder %v498, 8.507059e+37
        %v500 = vand.u32 %v443, 2147483648
        %v501 = vor.u32 1.1754944e-38, %v500
        %v502 = vsel %vm499, %v501, %v497
        %v503 = vmul.f32 1.0, %v502
        %v504 = vmul.f32 %v354, %v458
        %v505 = vmul.f32 %v377, %v473
        %v506 = vmul.f32 %v357, %v488
        %v507 = vmul.f32 %v380, %v503
        %v508 = vmul.f32 %v504, %v400
        %v509 = vmul.f32 %v505, %v423
        %v510 = vmul.f32 %v506, %v403
        %v511 = vmul.f32 %v507, %v426
        %v512 = vld [vmem:[#allocation2] sm:$0xff]
        %v513 = vld [vmem:[#allocation2 + $0x8] sm:$0xff]
        %v514 = vld [vmem:[%s236] sm:$0xff]
        %v515 = vld [vmem:[%s236 + $0x8] sm:$0xff]
        %v516 = vld [vmem:[%s236 + $0x10] sm:$0xff]
        %v517 = vld [vmem:[%s236 + $0x18] sm:$0xff]
        %v518 = vld [vmem:[%s236 + $0x20] sm:$0xff]
        %v519 = vld [vmem:[%s236 + $0x28] sm:$0xff]
        %v520 = vld [vmem:[%s236 + $0x30] sm:$0xff]
        %v521 = vld [vmem:[%s236 + $0x38] sm:$0xff]
        %v522 = vld [vmem:[%s236 + $0x40] sm:$0xff]
        %v523 = vld [vmem:[%s236 + $0x48] sm:$0xff]
        %v524 = vld [vmem:[%s236 + $0x50] sm:$0xff]
        %v525 = vld [vmem:[%s236 + $0x58] sm:$0xff]
        %v526 = vld [vmem:[%s236 + $0x60] sm:$0xff]
        %v527 = vld [vmem:[%s236 + $0x68] sm:$0xff]
        %v528 = vld [vmem:[%s236 + $0x70] sm:$0xff]
        %v529 = vld [vmem:[%s236 + $0x78] sm:$0xff]
        %v530 = vld [vmem:[%s236 + $0x80] sm:$0xff]
        %v531 = vld [vmem:[%s236 + $0x88] sm:$0xff]
        %v532 = vld [vmem:[%s236 + $0x90] sm:$0xff]
        %v533 = vld [vmem:[%s236 + $0x98] sm:$0xff]
        %v534 = vld [vmem:[%s236 + $0xa0] sm:$0xff]
        %v535 = vld [vmem:[%s236 + $0xa8] sm:$0xff]
        %v536 = vld [vmem:[%s236 + $0xb0] sm:$0xff]
        %v537 = vld [vmem:[%s236 + $0xb8] sm:$0xff]
        %v538 = vld [vmem:[%s236 + $0xc0] sm:$0xff]
        %v539 = vld [vmem:[%s236 + $0xc8] sm:$0xff]
        %v540 = vld [vmem:[%s236 + $0xd0] sm:$0xff]
        %v541 = vld [vmem:[%s236 + $0xd8] sm:$0xff]
        %v542 = vld [vmem:[%s236 + $0xe0] sm:$0xff]
        %v543 = vld [vmem:[%s236 + $0xe8] sm:$0xff]
        %v544 = vld [vmem:[%s236 + $0xf0] sm:$0xff]
        %v545 = vld [vmem:[%s236 + $0xf8] sm:$0xff]
        %546 = vmatpush.msra.mxu0 %v529
        %547 = vmatpush.msra.mxu0 %v528
        %548 = vmatpush.msra.mxu0 %v527
        %549 = vmatpush.msra.mxu0 %v526
        %550 = vmatpush.msra.mxu0 %v525
        %551 = vmatpush.msra.mxu0 %v524
        %552 = vmatpush.msra.mxu0 %v523
        %553 = vmatpush.msra.mxu0 %v522
        %554 = vmatpush.msra.mxu0 %v521
        %555 = vmatpush.msra.mxu0 %v520
        %556 = vmatpush.msra.mxu0 %v519
        %557 = vmatpush.msra.mxu0 %v518
        %558 = vmatpush.msra.mxu0 %v517
        %559 = vmatpush.msra.mxu0 %v516
        %560 = vmatpush.msra.mxu0 %v515
        %561 = vmatpush.msra.mxu0 %v514
        %562 = vmatmul.f32.gmra.mxu0 %v508
        %v563 = vpop.f32.mrf.mxu0
        %v564 = vadd.f32 0.0, %v563
        %565 = vmatmul.f32.gmra.mxu0 %v510
        %v566 = vpop.f32.mrf.mxu0
        %v567 = vadd.f32 0.0, %v566
        %568 = vdwg.mxu0
        %569 = vmatpush.msra.mxu0 %v545
        %570 = vmatpush.msra.mxu0 %v544
        %571 = vmatpush.msra.mxu0 %v543
        %572 = vmatpush.msra.mxu0 %v542
        %573 = vmatpush.msra.mxu0 %v541
        %574 = vmatpush.msra.mxu0 %v540
        %575 = vmatpush.msra.mxu0 %v539
        %576 = vmatpush.msra.mxu0 %v538
        %577 = vmatpush.msra.mxu0 %v537
        %578 = vmatpush.msra.mxu0 %v536
        %579 = vmatpush.msra.mxu0 %v535
        %580 = vmatpush.msra.mxu0 %v534
        %581 = vmatpush.msra.mxu0 %v533
        %582 = vmatpush.msra.mxu0 %v532
        %583 = vmatpush.msra.mxu0 %v531
        %584 = vmatpush.msra.mxu0 %v530
        %585 = vmatmul.f32.gmra.mxu0 %v509
        %v586 = vpop.f32.mrf.mxu0
        %v587 = vadd.f32 %v564, %v586
        %588 = vmatmul.f32.gmra.mxu0 %v511
        %v589 = vpop.f32.mrf.mxu0
        %v590 = vadd.f32 %v567, %v589
        %591 = vdwg.mxu0
        %v592 = vadd.f32 %v512, %v587
        %v593 = vadd.f32 %v513, %v590
        %594 = vst [vmem:[#allocation2] sm:$0xff] %v592
        %595 = vst [vmem:[#allocation2 + $0x8] sm:$0xff] %v593
        %p596 = scmp.eq.s32.totalorder %s24, 1
        // Predicated region
        $region49: #{tpu_custom_call.1} parent=31 // pred_check
          %p597 = pneg %p596
        $region50: #{tpu_custom_call.1} parent=31 // pred_check_branch
          %599 = sbr.rel (%p597) target = $region52
        $region51: #{tpu_custom_call.1} parent=31 // pred_region
          %v600 = vld [vmem:[#allocation2] sm:$0xff]
          %v601 = vld [vmem:[#allocation2 + $0x8] sm:$0xff]
          %602 = vst [vmem:[#allocation9] sm:$0xff] %v600
          %603 = vst [vmem:[#allocation9 + $0x8] sm:$0xff] %v601
        $region52: #{tpu_custom_call.1} parent=31 // pred_fallthru
          _
        // Predicated region
        $region53: #{tpu_custom_call.1} parent=31 // pred_check
          %p604 = pneg %p127
        $region54: #{tpu_custom_call.1} parent=31 // pred_check_branch
          %606 = sbr.rel (%p604) target = $region56
        $region55: #{tpu_custom_call.1} parent=31 // pred_region
          %s607 = smul.u32 2, %s23
          %609 = vsyncadd [#allocation5], 0
          %s610 = smul.addr %s607, 8
          %s611 = scalar_lea.hbm %s3, %s610
          %s612 = sshll.u32 [#allocation9], 4
          %s613 = int_to_ptr.vmem [resolvable:$true] %s612
          %s614 = sshll.u32 %s611, 4
          %s615 = int_to_ptr.hbm [resolvable:$true] %s614
          %620 = dma.vmem_to_hbm [thread:$0]  %s613, 256, %s615, [#allocation5], 128, 128, 8
        $region56: #{tpu_custom_call.1} parent=31 // pred_fallthru
          _
        // Predicated region
        $region57: #{tpu_custom_call.1} parent=31 // pred_check
          %p621 = pneg %p127
        $region58: #{tpu_custom_call.1} parent=31 // pred_check_branch
          %623 = sbr.rel (%p621) target = $region60
        $region59: #{tpu_custom_call.1} parent=31 // pred_region
          %625 = dma.done [#allocation5], 256
        $region60: #{tpu_custom_call.1} parent=31 // pred_fallthru
          _
      $region32: #{tpu_custom_call.1} parent=5 // pred_fallthru
        _
      %p626 = scmp.le.s32.totalorder 2, %s14
      // Predicated region
      $region61: #{tpu_custom_call.1} parent=5 // pred_check
        %p627 = pneg %p626
      $region62: #{tpu_custom_call.1} parent=5 // pred_check_branch
        %629 = sbr.rel (%p627) target = $region64
      $region63: #{tpu_custom_call.1} parent=5 // pred_region
        %s630 = ssub.s32 %s14, 2
      $region64: #{tpu_custom_call.1} parent=5 // pred_fallthru
        _
    $region6: #{tpu_custom_call.1} parent=1 // loop_footer
      %s18 = sadd.s32 1, %s14
    $region7: #{tpu_custom_call.1} parent=1 // loop_footer_branch
      %13 = sbr.rel target = $region3
    $region8: #{tpu_custom_call.1} parent=1 // loop_exit
      _
    %631 = vsyncpa [#allocation4], 1
    %s632 = scalar_lea.sflag [#allocation4], 1
    %633 = vsyncpa %s632, 1
    %634 = vsyncpa [#allocation7], 1
    %s635 = scalar_lea.sflag [#allocation7], 1
    %636 = vsyncpa %s635, 1
    %637 = vsyncpa [#allocation5], 1
    %s638 = scalar_lea.sflag [#allocation5], 1
    %639 = vsyncpa %s638, 1

</llo_original>
